<compile_context>
chip_gen: v6e
topology: v6e:2x2x1
jax: 0.10.0
libtpu: 0.0.40
codegen_flags: <defaults>
</compile_context>

<pallas_src>
import jax
import jax.numpy as jnp
from jax import lax
from jax.experimental import pallas as pl
from jax.experimental.pallas import tpu as pltpu

# --- fixed "module parameters" (set at construction time, baked as constants)
LOSS_WEIGHTS = (0.7, 0.3)      # CombineLoss(..., weights=[0.7, 0.3])
LABEL_SMOOTHING = 0.1          # for the second CrossEntropyLoss

# Algebraic fold of the two cross-entropies:
#   0.7*CE + 0.3*CE_smooth = mean( A * nll + B * uniform_nll )
_A = LOSS_WEIGHTS[0] + LOSS_WEIGHTS[1] * (1.0 - LABEL_SMOOTHING)   # 0.97
_B = LOSS_WEIGHTS[1] * LABEL_SMOOTHING                              # 0.03


def _make_kernel(n_total, tile_n, c, has_pad):
    """Kernel closure with static sizes / coefficients baked in."""
    inv_n = 1.0 / float(n_total)
    coef_lse = _A + _B                 # coefficient on log-sum-exp
    coef_tgt = _A                      # coefficient on target-class logit
    coef_sum = _B / float(c)           # coefficient on per-row logit sum (folds mean)

    def kernel(logits_ref, tgt_ref, out_ref, acc_ref):
        i = pl.program_id(0)
        last = pl.num_programs(0) - 1

        # init resident accumulator on the first tile
        @pl.when(i == 0)
        def _():
            acc_ref[...] = jnp.zeros_like(acc_ref)

        x = logits_ref[...].astype(jnp.float32)          # (tile_n, C) f32
        t = tgt_ref[...]                                  # (tile_n, 1) int32

        # numerically stable log-sum-exp per row (exp on EUP, reduces on XLU)
        m = jnp.max(x, axis=-1, keepdims=True)                              # (tile_n, 1)
        lse = jnp.log(jnp.sum(jnp.exp(x - m), axis=-1, keepdims=True)) + m  # (tile_n, 1)

        # gather the target-class logit with an iota/compare mask (lane gather)
        iota_c = lax.broadcasted_iota(jnp.int32, x.shape, 1)                # (tile_n, C)
        tgt_logit = jnp.sum(jnp.where(iota_c == t, x, 0.0),
                            axis=-1, keepdims=True)                          # (tile_n, 1)

        # per-row logit sum (for the label-smoothing uniform term, mean folded
        # into coef_sum so no per-row division is needed)
        row_sum = jnp.sum(x, axis=-1, keepdims=True)                         # (tile_n, 1)

        # folded per-sample loss:
        #   A*(lse - tgt) + B*(lse - mean) = (A+B)*lse - A*tgt - (B/C)*row_sum
        combined = coef_lse * lse - coef_tgt * tgt_logit - coef_sum * row_sum

        if has_pad:
            # mask rows belonging to wrapper-side zero padding (partial last tile)
            row = lax.broadcasted_iota(jnp.int32, (tile_n, 1), 0) + i * tile_n
            combined = jnp.where(row < n_total, combined, 0.0)

        # accumulate raw sum (divide by true N only once, at the end)
        acc_ref[...] += jnp.sum(combined, axis=0, keepdims=True)             # (1, 1)

        # write the scalar output exactly once
        @pl.when(i == last)
        def _():
            out_ref[...] = acc_ref[...] * inv_n

    return kernel


def combine_loss(logits, targets, *, tile_n=None):
    """logits: (N, C) float (f32 or bf16), targets: (N,) int class indices -> scalar f32."""
    n, c = logits.shape
    itemsize = jnp.dtype(logits.dtype).itemsize

    if tile_n is None:
        # Largest batch tile whose double-buffered footprint stays well under
        # v7x's scoped-VMEM default (~32 MiB); ~8 MiB per logits buffer.
        budget = 8 * 1024 * 1024
        tile_n = max(8, min(2048, budget // max(1, c * itemsize)))
    tile_n = max(8, (int(tile_n) // 8) * 8)      # sublane-aligned
    tile_n = min(tile_n, pl.cdiv(n, 8) * 8)      # don't tile beyond the batch

    n_pad = pl.cdiv(n, tile_n) * tile_n
    has_pad = n_pad != n
    tgt2d = targets.astype(jnp.int32).reshape(n, 1)
    if has_pad:
        # zero-pad so partial-tile rows are finite; they are masked in-kernel
        logits = jnp.pad(logits, ((0, n_pad - n), (0, 0)))
        tgt2d = jnp.pad(tgt2d, ((0, n_pad - n), (0, 0)))

    grid = (n_pad // tile_n,)
    kernel = _make_kernel(n, tile_n, c, has_pad)

    tile_bytes = tile_n * c * itemsize + tile_n * 4
    vmem_limit = int(min(100 * 2**20, max(16 * 2**20, 4 * tile_bytes)))

    # TODO(synk): for LLM-scale vocab (C >= 32K) add a second, last grid axis
    # over C with an online logsumexp (running max / sum-exp / target / sum-x).
    # TODO(synk): on v7x, split the batch axis into 2 'parallel' partial sums
    # (one per TensorCore) and reduce in the wrapper.
    out = pl.pallas_call(
        kernel,
        out_shape=jax.ShapeDtypeStruct((1, 1), jnp.float32),
        grid_spec=pltpu.PrefetchScalarGridSpec(
            num_scalar_prefetch=0,
            grid=grid,
            in_specs=[
                pl.BlockSpec((tile_n, c), lambda i: (i, 0)),
                pl.BlockSpec((tile_n, 1), lambda i: (i, 0)),
            ],
            out_specs=pl.BlockSpec((1, 1), lambda i: (0, 0)),
            scratch_shapes=[pltpu.VMEM((1, 1), jnp.float32)],
        ),
        compiler_params=pltpu.CompilerParams(
            dimension_semantics=("arbitrary",),     # resident accumulator -> serial axis
            vmem_limit_bytes=vmem_limit,
        ),
        cost_estimate=pl.CostEstimate(
            flops=6 * n * c,
            transcendentals=n * c,
            bytes_accessed=n * c * itemsize + n * 4 + 4,
        ),
    )(logits, tgt2d)
    return out[0, 0]


def _reference(logits, targets):
    # pure-JAX reference (mirrors PyTorch CrossEntropyLoss semantics)
    x = logits.astype(jnp.float32)
    lse = jax.nn.logsumexp(x, axis=-1)
    tgt_logit = jnp.take_along_axis(x, targets[:, None].astype(jnp.int32), axis=-1)[:, 0]
    nll = lse - tgt_logit
    uniform_nll = lse - jnp.mean(x, axis=-1)
    eps = LABEL_SMOOTHING
    ce_plain = jnp.mean(nll)
    ce_smooth = jnp.mean((1.0 - eps) * nll + eps * uniform_nll)
    return LOSS_WEIGHTS[0] * ce_plain + LOSS_WEIGHTS[1] * ce_smooth


if __name__ == "__main__":
    key = jax.random.PRNGKey(0)
    k1, k2 = jax.random.split(key)
    # N deliberately NOT a multiple of the tile so the partial-tile masking
    # and the multi-step accumulator are exercised. bf16 ingestion on purpose.
    N, C = 72, 128
    logits = jax.random.normal(k1, (N, C), dtype=jnp.float32).astype(jnp.bfloat16)
    targets = jax.random.randint(k2, (N,), 0, C, dtype=jnp.int32)

    loss = combine_loss(logits, targets, tile_n=16)   # grid of 5 tiles, last one partial
    jax.block_until_ready(loss)

    ref = _reference(logits, targets)
    assert jnp.allclose(loss, ref, rtol=1e-4, atol=1e-4), (loss, ref)

    # also exercise the no-padding / auto-tile path
    loss2 = combine_loss(logits[:64], targets[:64])
    jax.block_until_ready(loss2)
    ref2 = _reference(logits[:64], targets[:64])
    assert jnp.allclose(loss2, ref2, rtol=1e-4, atol=1e-4), (loss2, ref2)

    print("KERNEL_OK")
</pallas_src>

<mosaic_0001>
module attributes {stable_mosaic.version = 11 : i64} {
  func.func @kernel(%arg0: i32, %arg1: memref<16x128xbf16, #tpu.memory_space<vmem>>, %arg2: memref<16x1xi32, #tpu.memory_space<vmem>>, %arg3: memref<1x1xf32, #tpu.memory_space<vmem>>, %arg4: memref<1x1xf32, #tpu.memory_space<vmem>>) attributes {dimension_semantics = [#tpu.dimension_semantics<arbitrary>], iteration_bounds = array<i64: 5>, scalar_prefetch = 0 : i64, scratch_operands = 1 : i64, tpu.core_type = #tpu.core_type<tc>, window_params = [{transform_indices = @transform_0, window_bounds = array<i64: 16, 128>}, {transform_indices = @transform_1, window_bounds = array<i64: 16, 1>}, {pipeline_mode = #tpu.pipeline_mode<synchronous>, transform_indices = @transform_2, window_bounds = array<i64: 1, 1>}]} {
    %c0_i32 = arith.constant 0 : i32
    %0 = arith.cmpi eq, %arg0, %c0_i32 : i32
    %1 = arith.extui %0 : i1 to i32
    %c0_i32_0 = arith.constant 0 : i32
    %2 = arith.cmpi ne, %1, %c0_i32_0 : i32
    scf.if %2 {
      %cst_18 = arith.constant 0.000000e+00 : f32
      %48 = vector.broadcast %cst_18 : f32 to vector<1x1xf32>
      %c0_19 = arith.constant 0 : index
      %c0_20 = arith.constant 0 : index
      %49 = vector.load %arg4[%c0_19, %c0_20] : memref<1x1xf32, #tpu.memory_space<vmem>>, vector<1x1xf32>
      tpu.vector_store %arg4[%c0_19, %c0_20], %48 {strides = array<i32>} : memref<1x1xf32, #tpu.memory_space<vmem>>, vector<1x1xf32>,
    } else {
    }
    %c0 = arith.constant 0 : index
    %c0_1 = arith.constant 0 : index
    %3 = vector.load %arg1[%c0, %c0_1] : memref<16x128xbf16, #tpu.memory_space<vmem>>, vector<16x128xbf16>
    %4 = arith.extf %3 : vector<16x128xbf16> to vector<16x128xf32>
    %c0_2 = arith.constant 0 : index
    %c0_3 = arith.constant 0 : index
    %5 = vector.load %arg2[%c0_2, %c0_3] : memref<16x1xi32, #tpu.memory_space<vmem>>, vector<16x1xi32>
    %cst = arith.constant dense<0xFF800000> : vector<16xf32>
    %6 = vector.multi_reduction <maximumf>, %4, %cst [1] : vector<16x128xf32> to vector<16xf32>
    %7 = vector.shape_cast %6 : vector<16xf32> to vector<16x1xf32>
    %8 = vector.broadcast %7 : vector<16x1xf32> to vector<16x128xf32>
    %9 = arith.subf %4, %8 : vector<16x128xf32>
    %10 = math.exp %9 : vector<16x128xf32>
    %cst_4 = arith.constant dense<0.000000e+00> : vector<16xf32>
    %11 = vector.multi_reduction <add>, %10, %cst_4 [1] : vector<16x128xf32> to vector<16xf32>
    %12 = vector.shape_cast %11 : vector<16xf32> to vector<16x1xf32>
    %13 = math.log %12 : vector<16x1xf32>
    %14 = arith.addf %13, %7 : vector<16x1xf32>
    %15 = tpu.iota {dimensions = array<i32: 1>} : vector<16x128xi32>
    %16 = vector.broadcast %5 : vector<16x1xi32> to vector<16x128xi32>
    %17 = arith.cmpi eq, %15, %16 : vector<16x128xi32>
    %cst_5 = arith.constant 0.000000e+00 : f32
    %18 = vector.broadcast %cst_5 : f32 to vector<16x128xf32>
    %19 = arith.select %17, %4, %18 : vector<16x128xi1>, vector<16x128xf32>
    %cst_6 = arith.constant dense<0.000000e+00> : vector<16xf32>
    %20 = vector.multi_reduction <add>, %19, %cst_6 [1] : vector<16x128xf32> to vector<16xf32>
    %21 = vector.shape_cast %20 : vector<16xf32> to vector<16x1xf32>
    %cst_7 = arith.constant dense<0.000000e+00> : vector<16xf32>
    %22 = vector.multi_reduction <add>, %4, %cst_7 [1] : vector<16x128xf32> to vector<16xf32>
    %23 = vector.shape_cast %22 : vector<16xf32> to vector<16x1xf32>
    %cst_8 = arith.constant 1.000000e+00 : f32
    %24 = vector.broadcast %cst_8 : f32 to vector<16x1xf32>
    %25 = arith.mulf %24, %14 : vector<16x1xf32>
    %cst_9 = arith.constant 9.700000e-01 : f32
    %26 = vector.broadcast %cst_9 : f32 to vector<16x1xf32>
    %27 = arith.mulf %26, %21 : vector<16x1xf32>
    %28 = arith.subf %25, %27 : vector<16x1xf32>
    %cst_10 = arith.constant 2.343750e-04 : f32
    %29 = vector.broadcast %cst_10 : f32 to vector<16x1xf32>
    %30 = arith.mulf %29, %23 : vector<16x1xf32>
    %31 = arith.subf %28, %30 : vector<16x1xf32>
    %32 = tpu.iota {dimensions = array<i32: 0>} : vector<16x1xi32>
    %c16_i32 = arith.constant 16 : i32
    %33 = arith.muli %arg0, %c16_i32 : i32
    %34 = vector.broadcast %33 : i32 to vector<16x1xi32>
    %35 = arith.addi %32, %34 : vector<16x1xi32>
    %c72_i32 = arith.constant 72 : i32
    %36 = vector.broadcast %c72_i32 : i32 to vector<16x1xi32>
    %37 = arith.cmpi slt, %35, %36 : vector<16x1xi32>
    %cst_11 = arith.constant 0.000000e+00 : f32
    %38 = vector.broadcast %cst_11 : f32 to vector<16x1xf32>
    %39 = arith.select %37, %31, %38 : vector<16x1xi1>, vector<16x1xf32>
    %c0_12 = arith.constant 0 : index
    %c0_13 = arith.constant 0 : index
    %40 = vector.load %arg4[%c0_12, %c0_13] : memref<1x1xf32, #tpu.memory_space<vmem>>, vector<1x1xf32>
    %cst_14 = arith.constant dense<0.000000e+00> : vector<1xf32>
    %41 = vector.multi_reduction <add>, %39, %cst_14 [0] : vector<16x1xf32> to vector<1xf32>
    %42 = vector.shape_cast %41 : vector<1xf32> to vector<1x1xf32>
    %43 = arith.addf %40, %42 : vector<1x1xf32>
    %c0_15 = arith.constant 0 : index
    %c0_16 = arith.constant 0 : index
    %44 = vector.load %arg4[%c0_15, %c0_16] : memref<1x1xf32, #tpu.memory_space<vmem>>, vector<1x1xf32>
    tpu.vector_store %arg4[%c0_15, %c0_16], %43 {strides = array<i32>} : memref<1x1xf32, #tpu.memory_space<vmem>>, vector<1x1xf32>,
    %c4_i32 = arith.constant 4 : i32
    %45 = arith.cmpi eq, %arg0, %c4_i32 : i32
    %46 = arith.extui %45 : i1 to i32
    %c0_i32_17 = arith.constant 0 : i32
    %47 = arith.cmpi ne, %46, %c0_i32_17 : i32
    scf.if %47 {
      %c0_18 = arith.constant 0 : index
      %c0_19 = arith.constant 0 : index
      %48 = vector.load %arg4[%c0_18, %c0_19] : memref<1x1xf32, #tpu.memory_space<vmem>>, vector<1x1xf32>
      %cst_20 = arith.constant 0.013888889 : f32
      %49 = vector.broadcast %cst_20 : f32 to vector<1x1xf32>
      %50 = arith.mulf %48, %49 : vector<1x1xf32>
      %c0_21 = arith.constant 0 : index
      %c0_22 = arith.constant 0 : index
      %51 = vector.load %arg3[%c0_21, %c0_22] : memref<1x1xf32, #tpu.memory_space<vmem>>, vector<1x1xf32>
      tpu.vector_store %arg3[%c0_21, %c0_22], %50 {strides = array<i32>} : memref<1x1xf32, #tpu.memory_space<vmem>>, vector<1x1xf32>,
    } else {
    }
    return
  }
  func.func @transform_0(%arg0: i32) -> (i32, i32) {
    %c0_i32 = arith.constant 0 : i32
    %c0_i32_0 = arith.constant 0 : i32
    return %arg0, %c0_i32 : i32, i32
  }
  func.func @transform_1(%arg0: i32) -> (i32, i32) {
    %c0_i32 = arith.constant 0 : i32
    %c0_i32_0 = arith.constant 0 : i32
    return %arg0, %c0_i32 : i32, i32
  }
  func.func @transform_2(%arg0: i32) -> (i32, i32) {
    %c0_i32 = arith.constant 0 : i32
    %c0_i32_0 = arith.constant 0 : i32
    %c0_i32_1 = arith.constant 0 : i32
    return %c0_i32, %c0_i32_0 : i32, i32
  }
}

</mosaic_0001>

<llo_original>
// kernel: tpu_custom_call.1
$region0: #{tpu_custom_call.1}
  #allocation0 [shape = 'u32[]', space=smem, size = 0x4, offset = 0x4, fixed_abs, tag = 'smem constant byte address 0x4 - core index']
  #allocation1 [shape = 'u32[144,128]{1,0:T(1,128)}', space=vmem, size = 0x12000, scoped, tag = 'internal scratch']
  #allocation2 [shape = 'f32[1,1]{1,0:T(1,128)}', space=vmem, size = 0x200, scoped, tag = 'scratch operand']
  %s0 = inlined_call_operand.vmem [shape: bf16[80,128], index: 0, kind: input, shape index: {}]
  %s1 = inlined_call_operand.vmem [shape: s32[80,1], index: 1, kind: input, shape index: {}]
  %s2 = inlined_call_operand.hbm [shape: f32[1,1], index: 2, kind: output, shape index: {}]
  %s3 = sld [smem:[#allocation0]]
  $region49: #{tpu_custom_call.1} parent=0
    _
  %s5 = ssub.s32 1, %s3
  %s6 = scalar_select 0, %s5, %s3
  $region1: #{tpu_custom_call.1} parent=0
    #allocation3 [shape = 'u8[512]{0}', space=vmem, size = 0x400, scoped, tag = 'output window, operand 0, single buffered']
    #allocation4 [shape = 's32[2]{0}', space=sflag, size = 0x8, scoped, tag = 'scoped memory for tpu_custom_call.1']
    %7 = vsyncpa [#allocation4], 0
    loop: start=0, step=1, limit=7
    $region2: #{tpu_custom_call.1} parent=1 // loop_pre_header
      _
    $region3: #{tpu_custom_call.1} parent=1 // loop_header
      %s9 = sphi 0, %s13
      %p10 = scmp.ge.s32.totalorder %s9, 7
      %s19 = sphi 0, %s21
      %s22 = sphi 0, %s19
      %s23 = sphi 0, %s22
      %s39 = sphi 0, %s23
      %s45 = sphi 0, %s47
      %s48 = sphi 0, %s45
      %s49 = sphi 0, %s48
      %s65 = sphi 0, %s49
      %s69 = sphi 0, %s69
      %s71 = sphi 0, %s69
      %s72 = sphi 0, %s71
      %s86 = sphi 0, %s72
    $region4: #{tpu_custom_call.1} parent=1 // loop_header_branch
      %12 = sbr.rel (%p10) target = $region8
    $region5: #{tpu_custom_call.1} parent=1 // loop_body
      %s14 = ssub.s32 %s9, 1
      %s15 = ssub.s32 %s9, 2
      %s16 = sadd.s32 %s9, 1
      %s17 = ssub.s32 %s9, %s16
      %p18 = scmp.eq.s32.totalorder %s17, 0
      %s20 = sadd.s32 %s19, 1
      %s21 = scalar_select %p18, %s19, %s20
      %p24 = pneg %p18
      %p25 = scmp.eq.s32.totalorder %s9, 4
      %p26 = por %p24, %p25
      %p27 = scmp.ne.s32.totalorder %s19, %s22
      %p28 = scmp.eq.s32.totalorder %s9, 0
      %p29 = por %p27, %p28
      %p30 = scmp.ne.s32.totalorder %s19, %s22
      %p31 = scmp.eq.s32.totalorder %s14, 4
      %p32 = por %p30, %p31
      %p33 = scmp.ne.s32.totalorder %s22, %s23
      %p34 = scmp.eq.s32.totalorder %s14, 0
      %p35 = por %p33, %p34
      %p36 = scmp.ne.s32.totalorder %s22, %s23
      %p37 = scmp.eq.s32.totalorder %s15, 4
      %p38 = por %p36, %p37
      %p40 = scmp.ne.s32.totalorder %s23, %s39
      %p41 = scmp.eq.s32.totalorder %s15, 0
      %p42 = por %p40, %p41
      %s43 = ssub.s32 %s9, %s16
      %p44 = scmp.eq.s32.totalorder %s43, 0
      %s46 = sadd.s32 %s45, 1
      %s47 = scalar_select %p44, %s45, %s46
      %p50 = pneg %p44
      %p51 = scmp.eq.s32.totalorder %s9, 4
      %p52 = por %p50, %p51
      %p53 = scmp.ne.s32.totalorder %s45, %s48
      %p54 = scmp.eq.s32.totalorder %s9, 0
      %p55 = por %p53, %p54
      %p56 = scmp.ne.s32.totalorder %s45, %s48
      %p57 = scmp.eq.s32.totalorder %s14, 4
      %p58 = por %p56, %p57
      %p59 = scmp.ne.s32.totalorder %s48, %s49
      %p60 = scmp.eq.s32.totalorder %s14, 0
      %p61 = por %p59, %p60
      %p62 = scmp.ne.s32.totalorder %s48, %s49
      %p63 = scmp.eq.s32.totalorder %s15, 4
      %p64 = por %p62, %p63
      %p66 = scmp.ne.s32.totalorder %s49, %s65
      %p67 = scmp.eq.s32.totalorder %s15, 0
      %p68 = por %p66, %p67
      %s70 = sadd.s32 %s69, 1
      %p73 = scmp.eq.s32.totalorder %s9, 4
      %p74 = scmp.ne.s32.totalorder %s69, %s71
      %p75 = scmp.eq.s32.totalorder %s9, 0
      %p76 = por %p74, %p75
      %p77 = scmp.ne.s32.totalorder %s69, %s71
      %p78 = scmp.eq.s32.totalorder %s14, 4
      %p79 = por %p77, %p78
      %p80 = scmp.ne.s32.totalorder %s71, %s72
      %p81 = scmp.eq.s32.totalorder %s14, 0
      %p82 = por %p80, %p81
      %p83 = scmp.ne.s32.totalorder %s71, %s72
      %p84 = scmp.eq.s32.totalorder %s15, 4
      %p85 = por %p83, %p84
      %p87 = scmp.ne.s32.totalorder %s72, %s86
      %p88 = scmp.eq.s32.totalorder %s15, 0
      %p89 = por %p87, %p88
      %p90 = scmp.le.s32.totalorder 1, %s9
      %p91 = scmp.lt.s32.totalorder %s9, 6
      %p92 = pnand %p90, %p91
      %p93 = pneg %p92
      // Predicated region
      $region9: #{tpu_custom_call.1} parent=5 // pred_check
        _
      $region10: #{tpu_custom_call.1} parent=5 // pred_check_branch
        %95 = sbr.rel (%p92) target = $region12
      $region11: #{tpu_custom_call.1} parent=5 // pred_region
        %s96 = ssub.s32 %s9, 1
      $region12: #{tpu_custom_call.1} parent=5 // pred_fallthru
        _
      %p97 = scmp.lt.s32.totalorder %s9, 5
      // Predicated region
      $region13: #{tpu_custom_call.1} parent=5 // pred_check
        %p98 = pneg %p97
      $region14: #{tpu_custom_call.1} parent=5 // pred_check_branch
        %100 = sbr.rel (%p98) target = $region16
      $region15: #{tpu_custom_call.1} parent=5 // pred_region
        // Predicated region
        $region17: #{tpu_custom_call.1} parent=15 // pred_check
          %p101 = pneg %p29
        $region18: #{tpu_custom_call.1} parent=15 // pred_check_branch
          %103 = sbr.rel (%p101) target = $region20
        $region19: #{tpu_custom_call.1} parent=15 // pred_region
          %s104 = smul.u32 2, %s9
          %p105 = scmp.lt.s32.totalorder %s104, 9
          %s106 = scalar_select %p105, %s104, 9
          %s107 = smul.addr %s106, 4
          %s108 = scalar_lea.vmem %s0, %s107
          %s109 = smul.u32 2, %s9
        $region20: #{tpu_custom_call.1} parent=15 // pred_fallthru
          _
        // Predicated region
        $region21: #{tpu_custom_call.1} parent=15 // pred_check
          %p110 = pneg %p55
        $region22: #{tpu_custom_call.1} parent=15 // pred_check_branch
          %112 = sbr.rel (%p110) target = $region24
        $region23: #{tpu_custom_call.1} parent=15 // pred_region
          %s113 = smul.u32 2, %s9
          %p114 = scmp.lt.s32.totalorder %s113, 9
          %s115 = scalar_select %p114, %s113, 9
          %s116 = smul.addr %s115, 8
          %s117 = scalar_lea.vmem %s1, %s116
          %s118 = smul.u32 2, %s9
        $region24: #{tpu_custom_call.1} parent=15 // pred_fallthru
          _
      $region16: #{tpu_custom_call.1} parent=5 // pred_fallthru
        _
      %p119 = scmp.le.s32.totalorder 1, %s9
      %p120 = scmp.lt.s32.totalorder %s9, 6
      %p121 = pnand %p119, %p120
      %p122 = pneg %p121
      // Predicated region
      $region25: #{tpu_custom_call.1} parent=5 // pred_check
        _
      $region26: #{tpu_custom_call.1} parent=5 // pred_check_branch
        %124 = sbr.rel (%p121) target = $region28
      $region27: #{tpu_custom_call.1} parent=5 // pred_region
        %s125 = ssub.s32 %s9, 1
        %s126 = smul.u32 2, %s14
        %p127 = scmp.lt.s32.totalorder %s126, 9
        %s128 = scalar_select %p127, %s126, 9
        %s129 = smul.addr %s128, 4
        %s130 = scalar_lea.vmem %s0, %s129
        %p131 = pneg %p35
        %p132 = pneg %p32
        %s133 = smul.u32 2, %s14
        %p134 = scmp.lt.s32.totalorder %s133, 9
        %s135 = scalar_select %p134, %s133, 9
        %s136 = smul.addr %s135, 8
        %s137 = scalar_lea.vmem %s1, %s136
        %p138 = pneg %p61
        %p139 = pneg %p58
        %p140 = pneg %p82
        %p141 = pneg %p79
        %s142 = smul.u32 2, %s14
        %p143 = scmp.lt.s32.totalorder %s142, 9
        %s144 = scalar_select %p143, %s142, 9
        %s145 = smul.addr %s144, 4
        %s146 = scalar_lea.vmem %s0, %s145
        %s147 = smul.u32 2, %s14
        %s148 = smul.u32 2, %s14
        %p149 = scmp.lt.s32.totalorder %s148, 9
        %s150 = scalar_select %p149, %s148, 9
        %s151 = smul.addr %s150, 8
        %s152 = scalar_lea.vmem %s1, %s151
        %s153 = smul.u32 2, %s14
        %p154 = scmp.eq.s32.totalorder %s14, 0
        // Predicated region
        $region29: #{tpu_custom_call.1} parent=27 // pred_check
          %p155 = pneg %p154
        $region30: #{tpu_custom_call.1} parent=27 // pred_check_branch
          %157 = sbr.rel (%p155) target = $region32
        $region31: #{tpu_custom_call.1} parent=27 // pred_region
          %vm158 = vcmask 0
          %159 = vst.msk [vmem:[#allocation2] sm:$0x1] %vm158, 0.0
        $region32: #{tpu_custom_call.1} parent=27 // pred_fallthru
          _
        %v160 = vld [vmem:[%s146] sm:$0xf]
        %v161 = vld [vmem:[%s146 + $0x4] sm:$0xf]
        %v162 = vunpack.c.l.bf16 %v160
        %v163 = vunpack.c.l.bf16 %v161
        %v164 = vld [vmem:[%s152] sm:$0xff]
        %v165 = vld [vmem:[%s152 + $0x8] sm:$0xff]
        %166 = vmax.xlane.f32.xlu0 %v162
        %v167 = vpop.xlane.xlu0 %166
        %168 = vmax.xlane.f32.xlu0 %v163
        %v169 = vpop.xlane.xlu0 %168
        %v170 = vsub.f32 %v162, %v167
        %v171 = vsub.f32 %v163, %v169
        %v172 = vmul.f32 %v170, 1.442695
        %v173 = vpow.pop %v172
        %v174 = vmul.f32 %v171, 1.442695
        %v175 = vpow.pop %v174
        %176 = vadd.xlane.f32.xlu0 %v173
        %v177 = vpop.xlane.xlu0 %176
        %178 = vadd.xlane.f32.xlu0 %v175
        %v179 = vpop.xlane.xlu0 %178
        %v180 = vlog2.pop %v177
        %v181 = vmul.f32 %v180, 0.6931472
        %v182 = vlog2.pop %v179
        %v183 = vmul.f32 %v182, 0.6931472
        %v184 = vadd.f32 %v181, %v167
        %v185 = vadd.f32 %v183, %v169
        %v186 = vlaneseq
        %v187 = vand.u32 %v186, 127
        %188 = vset.pattern.permute.xlu0 0
        %189 = vperm.xlu0 %188, %v164
        %v190 = vpop.permute.xlu0 %189
        %191 = vset.pattern.permute.xlu0 0
        %192 = vperm.xlu0 %191, %v165
        %v193 = vpop.permute.xlu0 %192
        %vm194 = vcmp.eq.s32.totalorder %v187, %v190
        %vm195 = vcmp.eq.s32.totalorder %v187, %v193
        %v196 = vsel %vm194, %v162, 0.0
        %v197 = vsel %vm195, %v163, 0.0
        %198 = vadd.xlane.f32.xlu0 %v196
        %v199 = vpop.xlane.xlu0 %198
        %200 = vadd.xlane.f32.xlu0 %v197
        %v201 = vpop.xlane.xlu0 %200
        %202 = vadd.xlane.f32.xlu0 %v162
        %v203 = vpop.xlane.xlu0 %202
        %204 = vadd.xlane.f32.xlu0 %v163
        %v205 = vpop.xlane.xlu0 %204
        %v206 = vmul.f32 %v199, 0.97
        %v207 = vmul.f32 %v201, 0.97
        %v208 = vsub.f32 %v184, %v206
        %v209 = vsub.f32 %v185, %v207
        %v210 = vmul.f32 %v203, 0.000234375
        %v211 = vmul.f32 %v205, 0.000234375
        %v212 = vsub.f32 %v208, %v210
        %v213 = vsub.f32 %v209, %v211
        %v214 = vlaneseq
        %v215 = vshrl.u32 %v214, 7
        %v216 = vadd.s32 %v215, 8
        %s217 = smul.u32 %s14, 16
        %v218 = vstv %s217
        %v219 = vadd.s32 %v215, %v218
        %v220 = vadd.s32 %v216, %v218
        %vm221 = vcmp.lt.s32.totalorder %v219, 72
        %vm222 = vcmp.lt.s32.totalorder %v220, 72
        %v223 = vsel %vm221, %v212, 0.0
        %v224 = vsel %vm222, %v213, 0.0
        %v225 = vld [vmem:[#allocation2] sm:$0x1]
        %v226 = vadd.f32 %v223, %v224
        %v227 = vrot.slane %v226, 4
        %v228 = vadd.f32 %v226, %v227
        %v229 = vrot.slane %v228, 2
        %v230 = vadd.f32 %v228, %v229
        %v231 = vrot.slane %v230, 1
        %v232 = vadd.f32 %v230, %v231
        %v233 = vadd.f32 %v225, %v232
        %vm234 = vcmask 0
        %235 = vst.msk [vmem:[#allocation2] sm:$0x1] %vm234, %v233
        %p236 = scmp.eq.s32.totalorder %s14, 4
        // Predicated region
        $region33: #{tpu_custom_call.1} parent=27 // pred_check
          %p237 = pneg %p236
        $region34: #{tpu_custom_call.1} parent=27 // pred_check_branch
          %239 = sbr.rel (%p237) target = $region36
        $region35: #{tpu_custom_call.1} parent=27 // pred_region
          %v240 = vld [vmem:[#allocation2] sm:$0x1]
          %v241 = vmul.f32 %v240, 0.013888889
          %242 = vst.msk [vmem:[#allocation3] sm:$0x1] %vm234, %v241
        $region36: #{tpu_custom_call.1} parent=27 // pred_fallthru
          _
        // Predicated region
        $region37: #{tpu_custom_call.1} parent=27 // pred_check
          %p243 = pneg %p79
        $region38: #{tpu_custom_call.1} parent=27 // pred_check_branch
          %245 = sbr.rel (%p243) target = $region40
        $region39: #{tpu_custom_call.1} parent=27 // pred_region
          %s247 = ssub.s32 16, 16
          %248 = vsyncadd [#allocation4], %s247
          %s250 = sshll.u32 [#allocation3], 4
          %s251 = int_to_ptr.vmem [resolvable:$true] %s250
          %253 = dma.vmem_to_hbm [thread:$0]  %s251, 16, %s2, [#allocation4]
        $region40: #{tpu_custom_call.1} parent=27 // pred_fallthru
          _
        // Predicated region
        $region41: #{tpu_custom_call.1} parent=27 // pred_check
          %p254 = pneg %p79
        $region42: #{tpu_custom_call.1} parent=27 // pred_check_branch
          %256 = sbr.rel (%p254) target = $region44
        $region43: #{tpu_custom_call.1} parent=27 // pred_region
          %257 = dma.done [#allocation4], 16
        $region44: #{tpu_custom_call.1} parent=27 // pred_fallthru
          _
      $region28: #{tpu_custom_call.1} parent=5 // pred_fallthru
        _
      %p258 = scmp.le.s32.totalorder 2, %s9
      // Predicated region
      $region45: #{tpu_custom_call.1} parent=5 // pred_check
        %p259 = pneg %p258
      $region46: #{tpu_custom_call.1} parent=5 // pred_check_branch
        %261 = sbr.rel (%p259) target = $region48
      $region47: #{tpu_custom_call.1} parent=5 // pred_region
        %s262 = ssub.s32 %s9, 2
      $region48: #{tpu_custom_call.1} parent=5 // pred_fallthru
        _
    $region6: #{tpu_custom_call.1} parent=1 // loop_footer
      %s13 = sadd.s32 1, %s9
    $region7: #{tpu_custom_call.1} parent=1 // loop_footer_branch
      %8 = sbr.rel target = $region3
    $region8: #{tpu_custom_call.1} parent=1 // loop_exit
      _
    %263 = vsyncpa [#allocation4], 1
    %s264 = scalar_lea.sflag [#allocation4], 1
    %265 = vsyncpa %s264, 1

</llo_original>
